<compile_context>
chip_gen: v7x
topology: tpu7x:2x2x1
jax: 0.10.0
libtpu: 0.0.40
codegen_flags: <defaults>
</compile_context>

<pallas_src>
import math

import jax
import jax.numpy as jnp
from jax import lax
from jax.experimental import pallas as pl
from jax.experimental.pallas import tpu as pltpu


_DN_LAST_LAST = (((1,), (1,)), ((), ()))   # contract a[-1] with b[-1]  (== a @ b.T)
_LANES = 128                               # lane width for lane-dense scratches
_VMEM_LIMIT = 64 * 1024 * 1024             # scoped-VMEM cap (v7x physical = 64 MiB)


def _tile(n, preferred):
    """Full dim if small, else the preferred production tile (must divide n)."""
    if n <= preferred:
        return n
    assert n % preferred == 0, f"dim {n} must be a multiple of tile {preferred}"
    return preferred


def _pick_head_group(num_heads, head_dim):
    """Largest divisor G of num_heads with 3*G*hd <= 2048: keeps the stacked QKV
    matmul N-width wide (>=512 at hd=128 -> G=4..5) while bounding the weight
    block / accumulator VMEM footprint."""
    best = 1
    for g in range(1, num_heads + 1):
        if num_heads % g == 0 and 3 * g * head_dim <= 2048:
            best = g
    return best


# ----------------------------------------------------------------------------
# Kernel 1: fused, head-grouped QKV projection.
# grid = (B, S//TS, H//G, D//TKD)   -- last axis is the K reduction ("arbitrary")
# One (TS, TKD) x (3*G*hd, TKD)^T matmul per step into a (TS, 3*G*hd) f32 acc.
# ----------------------------------------------------------------------------
def _qkv_proj_kernel(x_ref, w_ref, q_ref, k_ref, v_ref, acc_ref):
    grp = q_ref.shape[1]        # G heads per group (static)
    hd = q_ref.shape[3]         # head dim (static)
    ki = pl.program_id(3)

    @pl.when(ki == 0)
    def _():
        acc_ref[...] = jnp.zeros_like(acc_ref)

    x = x_ref[0]                # (TS, TKD)        bf16
    w = w_ref[0]                # (3*G*hd, TKD)    bf16, (out, in) layout slice
    acc_ref[...] += lax.dot_general(x, w, _DN_LAST_LAST,
                                    preferred_element_type=jnp.float32)

    @pl.when(ki == pl.num_programs(3) - 1)
    def _():
        acc = acc_ref[...]      # (TS, 3*G*hd); 1/sqrt(hd) already folded into Wq
        for j in range(grp):    # static unroll: per-head lane slices of the acc
            q_ref[0, j] = acc[:, j * hd:(j + 1) * hd].astype(q_ref.dtype)
            k_ref[0, j] = acc[:, (grp + j) * hd:(grp + j + 1) * hd].astype(k_ref.dtype)
            v_ref[0, j] = acc[:, (2 * grp + j) * hd:(2 * grp + j + 1) * hd].astype(v_ref.dtype)


# ----------------------------------------------------------------------------
# Kernel 2: flash attention (online softmax, no (H,S,S) materialization).
# grid = (B, H, S//TQ, S//TKV)   -- kv axis is the reduction ("arbitrary")
# m/l scratches are lane-dense (TQ, 128): full-lane stores, no masked vst.
# ----------------------------------------------------------------------------
def _flash_attn_kernel(q_ref, k_ref, v_ref, o_ref, m_ref, l_ref, acc_ref):
    kv = pl.program_id(3)

    @pl.when(kv == 0)
    def _():
        m_ref[...] = jnp.full_like(m_ref, -jnp.inf)
        l_ref[...] = jnp.zeros_like(l_ref)
        acc_ref[...] = jnp.zeros_like(acc_ref)

    q = q_ref[0, 0]             # (TQ,  hd) bf16, scale already folded into Wq
    k = k_ref[0, 0]             # (TKV, hd) bf16
    v = v_ref[0, 0]             # (TKV, hd) bf16

    s = lax.dot_general(q, k, _DN_LAST_LAST,
                        preferred_element_type=jnp.float32)          # (TQ, TKV) f32

    m_prev = m_ref[...]                                              # (TQ, 128)
    m_next = jnp.maximum(m_prev, jnp.max(s, axis=-1, keepdims=True)) # (TQ, 128)
    alpha = jnp.exp(m_prev - m_next)                                 # (TQ, 128)
    p = jnp.exp(s - m_next[:, :1])                                   # (TQ, TKV)

    l_ref[...] = alpha * l_ref[...] + jnp.sum(p, axis=-1, keepdims=True)
    acc_ref[...] = alpha[:, :1] * acc_ref[...] + jnp.dot(
        p.astype(v.dtype), v, preferred_element_type=jnp.float32)
    m_ref[...] = m_next

    @pl.when(kv == pl.num_programs(3) - 1)
    def _():
        inv_l = pl.reciprocal(l_ref[:, :1], approx=True)             # EUP, not VALU
        o_ref[0, 0] = (acc_ref[...] * inv_l).astype(o_ref.dtype)


# ----------------------------------------------------------------------------
# Kernel 3: output projection, consuming ctx directly in (B, H, S, hd) layout
# (no wrapper transpose / extra HBM round-trip).  Head merge = in-VMEM lane
# concat of the G per-head slabs -> contraction depth G*hd per step.
# grid = (B, S//TS, D//TN, H//G)   -- head-group axis is the reduction
# ----------------------------------------------------------------------------
def _out_proj_kernel(ctx_ref, wo_ref, o_ref, acc_ref):
    grp = ctx_ref.shape[1]
    gi = pl.program_id(3)

    @pl.when(gi == 0)
    def _():
        acc_ref[...] = jnp.zeros_like(acc_ref)

    if grp == 1:
        c = ctx_ref[0, 0]                                            # (TS, hd)
    else:
        c = jnp.concatenate([ctx_ref[0, j] for j in range(grp)], axis=-1)  # (TS, G*hd)
    w = wo_ref[0]                                                    # (TN, G*hd)
    acc_ref[...] += lax.dot_general(c, w, _DN_LAST_LAST,
                                    preferred_element_type=jnp.float32)

    @pl.when(gi == pl.num_programs(3) - 1)
    def _():
        o_ref[0] = acc_ref[...].astype(o_ref.dtype)                  # lane-dense (TS, TN)


# ----------------------------------------------------------------------------
# Wrapper
# ----------------------------------------------------------------------------
def llama_attention(x, wq, wk, wv, wo, num_heads):
    """x: (B, S, D).  wq/wk/wv/wo: (D, D) PyTorch nn.Linear weights (y = x @ W.T).
    Returns (B, S, D) in x.dtype."""
    B, S, D = x.shape
    assert D % num_heads == 0
    hd = D // num_heads
    scale = 1.0 / math.sqrt(hd)
    out_dtype = x.dtype

    cdt = jnp.bfloat16
    G = _pick_head_group(num_heads, hd)      # heads per group (toy: all 8; prod hd=128: 4)
    HG = num_heads // G
    NQKV = 3 * G * hd

    xb = x.astype(cdt)
    # One-time weight prep (load-time glue, all in the (out, in) layout):
    #  * 1/sqrt(hd) folded into Wq (f32 multiply before the bf16 cast),
    #  * Q/K/V stacked per head-group -> single wide matmul per reduction step,
    #  * Wo regrouped to (HG, D, G*hd) so the o-proj contracts per head-group.
    wq_g = (wq * scale).reshape(HG, G * hd, D)
    wk_g = wk.reshape(HG, G * hd, D)
    wv_g = wv.reshape(HG, G * hd, D)
    w_qkv = jnp.concatenate([wq_g, wk_g, wv_g], axis=1).astype(cdt)   # (HG, 3*G*hd, D)
    wo_g = wo.reshape(D, HG, G * hd).transpose(1, 0, 2).astype(cdt)   # (HG, D, G*hd)

    # Tile targets (collapse to full dims at the toy shape).  Sized so every
    # kernel stays well under the 32 MiB scoped-VMEM default even at D=4096.
    TS = _tile(S, 512)      # projection M tile
    TQ = _tile(S, 512)      # flash-attention query tile
    TKV = _tile(S, 1024)    # flash-attention kv tile
    TKD = _tile(D, 512)     # K tile of the D contraction (QKV projection)
    TN = _tile(D, 1024)     # o-proj output N tile (keeps acc VMEM-safe on v7x)

    # ---- 1) fused, head-grouped QKV projection ------------------------------
    qkv_shape = jax.ShapeDtypeStruct((B, num_heads, S, hd), cdt)
    q, k, v = pl.pallas_call(
        _qkv_proj_kernel,
        out_shape=(qkv_shape, qkv_shape, qkv_shape),
        grid_spec=pltpu.PrefetchScalarGridSpec(
            num_scalar_prefetch=0,
            grid=(B, S // TS, HG, D // TKD),
            in_specs=[
                pl.BlockSpec((1, TS, TKD), lambda b, si, g, ki: (b, si, ki)),
                pl.BlockSpec((1, NQKV, TKD), lambda b, si, g, ki: (g, 0, ki)),
            ],
            out_specs=(
                pl.BlockSpec((1, G, TS, hd), lambda b, si, g, ki: (b, g, si, 0)),
                pl.BlockSpec((1, G, TS, hd), lambda b, si, g, ki: (b, g, si, 0)),
                pl.BlockSpec((1, G, TS, hd), lambda b, si, g, ki: (b, g, si, 0)),
            ),
            scratch_shapes=[pltpu.VMEM((TS, NQKV), jnp.float32)],
        ),
        compiler_params=pltpu.CompilerParams(
            dimension_semantics=("parallel", "parallel", "parallel", "arbitrary"),
            vmem_limit_bytes=_VMEM_LIMIT),
    )(xb, w_qkv)

    # ---- 2) flash attention --------------------------------------------------
    ctx = pl.pallas_call(
        _flash_attn_kernel,
        out_shape=jax.ShapeDtypeStruct((B, num_heads, S, hd), cdt),
        grid_spec=pltpu.PrefetchScalarGridSpec(
            num_scalar_prefetch=0,
            grid=(B, num_heads, S // TQ, S // TKV),
            in_specs=[
                pl.BlockSpec((1, 1, TQ, hd), lambda b, h, qi, ki: (b, h, qi, 0)),
                pl.BlockSpec((1, 1, TKV, hd), lambda b, h, qi, ki: (b, h, ki, 0)),
                pl.BlockSpec((1, 1, TKV, hd), lambda b, h, qi, ki: (b, h, ki, 0)),
            ],
            out_specs=pl.BlockSpec((1, 1, TQ, hd), lambda b, h, qi, ki: (b, h, qi, 0)),
            scratch_shapes=[
                pltpu.VMEM((TQ, _LANES), jnp.float32),   # running max   (lane-dense)
                pltpu.VMEM((TQ, _LANES), jnp.float32),   # running denom (lane-dense)
                pltpu.VMEM((TQ, hd), jnp.float32),       # running accumulator
            ],
        ),
        compiler_params=pltpu.CompilerParams(
            dimension_semantics=("parallel", "parallel", "parallel", "arbitrary"),
            vmem_limit_bytes=_VMEM_LIMIT),
    )(q, k, v)

    # ---- 3) output projection (head merge happens inside the kernel) --------
    out = pl.pallas_call(
        _out_proj_kernel,
        out_shape=jax.ShapeDtypeStruct((B, S, D), out_dtype),
        grid_spec=pltpu.PrefetchScalarGridSpec(
            num_scalar_prefetch=0,
            grid=(B, S // TS, D // TN, HG),
            in_specs=[
                pl.BlockSpec((1, G, TS, hd), lambda b, si, ni, g: (b, g, si, 0)),
                pl.BlockSpec((1, TN, G * hd), lambda b, si, ni, g: (g, ni, 0)),
            ],
            out_specs=pl.BlockSpec((1, TS, TN), lambda b, si, ni, g: (b, si, ni)),
            scratch_shapes=[pltpu.VMEM((TS, TN), jnp.float32)],
        ),
        compiler_params=pltpu.CompilerParams(
            dimension_semantics=("parallel", "parallel", "parallel", "arbitrary"),
            vmem_limit_bytes=_VMEM_LIMIT),
    )(ctx, wo_g)
    return out


def llama_attention_ref(x, wq, wk, wv, wo, num_heads):
    """Pure-JAX f32 reference mirroring the PyTorch forward."""
    B, S, D = x.shape
    hd = D // num_heads
    q = x @ wq.T
    k = x @ wk.T
    v = x @ wv.T
    q = q.reshape(B, S, num_heads, hd).transpose(0, 2, 1, 3)
    k = k.reshape(B, S, num_heads, hd).transpose(0, 2, 1, 3)
    v = v.reshape(B, S, num_heads, hd).transpose(0, 2, 1, 3)
    scores = jnp.einsum('bhqd,bhkd->bhqk', q, k) / math.sqrt(hd)
    attn = jax.nn.softmax(scores, axis=-1)
    ctx = jnp.einsum('bhqk,bhkd->bhqd', attn, v)
    ctx = ctx.transpose(0, 2, 1, 3).reshape(B, S, D)
    return ctx @ wo.T


if __name__ == "__main__":
    B, S, D = 2, 8, 32
    NUM_HEADS = 8

    key = jax.random.PRNGKey(0)
    kx, kq, kk, kv_, ko = jax.random.split(key, 5)

    # Deterministic "nn.Linear"-style init: U(-1/sqrt(D), 1/sqrt(D)).
    bound = 1.0 / math.sqrt(D)
    x = jax.random.normal(kx, (B, S, D), dtype=jnp.float32)
    wq = jax.random.uniform(kq, (D, D), jnp.float32, -bound, bound)
    wk = jax.random.uniform(kk, (D, D), jnp.float32, -bound, bound)
    wv = jax.random.uniform(kv_, (D, D), jnp.float32, -bound, bound)
    wo = jax.random.uniform(ko, (D, D), jnp.float32, -bound, bound)

    out = llama_attention(x, wq, wk, wv, wo, NUM_HEADS)
    out = jax.block_until_ready(out)

    ref = llama_attention_ref(x, wq, wk, wv, wo, NUM_HEADS)
    assert out.shape == (B, S, D)
    # bf16 MXU operands (f32 accumulation) -> compare at bf16-appropriate tolerance.
    assert jnp.allclose(out, ref, atol=3e-2, rtol=3e-2), "mismatch vs reference"

    print("KERNEL_OK")
</pallas_src>

<mosaic_0001>
module attributes {stable_mosaic.version = 11 : i64} {
  func.func @_qkv_proj_kernel(%arg0: i32, %arg1: i32, %arg2: i32, %arg3: i32, %arg4: memref<1x8x32xbf16, #tpu.memory_space<vmem>>, %arg5: memref<1x96x32xbf16, #tpu.memory_space<vmem>>, %arg6: memref<1x8x8x4xbf16, #tpu.memory_space<vmem>>, %arg7: memref<1x8x8x4xbf16, #tpu.memory_space<vmem>>, %arg8: memref<1x8x8x4xbf16, #tpu.memory_space<vmem>>, %arg9: memref<8x96xf32, #tpu.memory_space<vmem>>) attributes {dimension_semantics = [#tpu.dimension_semantics<parallel>, #tpu.dimension_semantics<parallel>, #tpu.dimension_semantics<parallel>, #tpu.dimension_semantics<arbitrary>], iteration_bounds = array<i64: 2, 1, 1, 1>, scalar_prefetch = 0 : i64, scratch_operands = 1 : i64, tpu.core_type = #tpu.core_type<tc>, window_params = [{transform_indices = @transform_0, window_bounds = array<i64: 1, 8, 32>}, {transform_indices = @transform_1, window_bounds = array<i64: 1, 96, 32>}, {transform_indices = @transform_2, window_bounds = array<i64: 1, 8, 8, 4>}, {transform_indices = @transform_3, window_bounds = array<i64: 1, 8, 8, 4>}, {transform_indices = @transform_4, window_bounds = array<i64: 1, 8, 8, 4>}]} {
    %c0_i32 = arith.constant 0 : i32
    %0 = arith.cmpi eq, %arg3, %c0_i32 : i32
    %1 = arith.extui %0 : i1 to i32
    %c0_i32_0 = arith.constant 0 : i32
    %2 = arith.cmpi ne, %1, %c0_i32_0 : i32
    scf.if %2 {
      %cst_12 = arith.constant 0.000000e+00 : f32
      %14 = vector.broadcast %cst_12 : f32 to vector<8x96xf32>
      %c0_13 = arith.constant 0 : index
      %c0_14 = arith.constant 0 : index
      %15 = vector.load %arg9[%c0_13, %c0_14] : memref<8x96xf32, #tpu.memory_space<vmem>>, vector<8x96xf32>
      tpu.vector_store %arg9[%c0_13, %c0_14], %14 {strides = array<i32>} : memref<8x96xf32, #tpu.memory_space<vmem>>, vector<8x96xf32>,
    } else {
    }
    %c0 = arith.constant 0 : index
    %c0_1 = arith.constant 0 : index
    %c0_2 = arith.constant 0 : index
    %3 = vector.load %arg4[%c0, %c0_1, %c0_2] : memref<1x8x32xbf16, #tpu.memory_space<vmem>>, vector<1x8x32xbf16>
    %4 = vector.shape_cast %3 : vector<1x8x32xbf16> to vector<8x32xbf16>
    %c0_3 = arith.constant 0 : index
    %c0_4 = arith.constant 0 : index
    %c0_5 = arith.constant 0 : index
    %5 = vector.load %arg5[%c0_3, %c0_4, %c0_5] : memref<1x96x32xbf16, #tpu.memory_space<vmem>>, vector<1x96x32xbf16>
    %6 = vector.shape_cast %5 : vector<1x96x32xbf16> to vector<96x32xbf16>
    %c0_6 = arith.constant 0 : index
    %c0_7 = arith.constant 0 : index
    %7 = vector.load %arg9[%c0_6, %c0_7] : memref<8x96xf32, #tpu.memory_space<vmem>>, vector<8x96xf32>
    %cst = arith.constant dense<0.000000e+00> : vector<8x96xf32>
    %8 = tpu.matmul %4, %6, %cst {dimension_numbers = #tpu.dot_dimension_numbers<[1], [1], [0], [0], [0, 0, 1, 0], [], []>} : vector<8x32xbf16>, vector<96x32xbf16>, vector<8x96xf32> -> vector<8x96xf32>
    %9 = arith.addf %7, %8 : vector<8x96xf32>
    %c0_8 = arith.constant 0 : index
    %c0_9 = arith.constant 0 : index
    %10 = vector.load %arg9[%c0_8, %c0_9] : memref<8x96xf32, #tpu.memory_space<vmem>>, vector<8x96xf32>
    tpu.vector_store %arg9[%c0_8, %c0_9], %9 {strides = array<i32>} : memref<8x96xf32, #tpu.memory_space<vmem>>, vector<8x96xf32>,
    %c0_i32_10 = arith.constant 0 : i32
    %11 = arith.cmpi eq, %arg3, %c0_i32_10 : i32
    %12 = arith.extui %11 : i1 to i32
    %c0_i32_11 = arith.constant 0 : i32
    %13 = arith.cmpi ne, %12, %c0_i32_11 : i32
    scf.if %13 {
      %c0_12 = arith.constant 0 : index
      %c0_13 = arith.constant 0 : index
      %14 = vector.load %arg9[%c0_12, %c0_13] : memref<8x96xf32, #tpu.memory_space<vmem>>, vector<8x96xf32>
      %15 = vector.extract_strided_slice %14 {offsets = [0, 0], sizes = [8, 4], strides = [1, 1]} : vector<8x96xf32> to vector<8x4xf32>
      %16 = arith.truncf %15 : vector<8x4xf32> to vector<8x4xbf16>
      %c0_14 = arith.constant 0 : index
      %c0_15 = arith.constant 0 : index
      %c0_16 = arith.constant 0 : index
      %c0_17 = arith.constant 0 : index
      %17 = vector.load %arg6[%c0_14, %c0_15, %c0_16, %c0_17] : memref<1x8x8x4xbf16, #tpu.memory_space<vmem>>, vector<1x1x8x4xbf16>
      %18 = vector.shape_cast %17 : vector<1x1x8x4xbf16> to vector<8x4xbf16>
      %19 = vector.shape_cast %16 : vector<8x4xbf16> to vector<1x1x8x4xbf16>
      tpu.vector_store %arg6[%c0_14, %c0_15, %c0_16, %c0_17], %19 {strides = array<i32>} : memref<1x8x8x4xbf16, #tpu.memory_space<vmem>>, vector<1x1x8x4xbf16>,
      %20 = vector.extract_strided_slice %14 {offsets = [0, 32], sizes = [8, 4], strides = [1, 1]} : vector<8x96xf32> to vector<8x4xf32>
      %21 = arith.truncf %20 : vector<8x4xf32> to vector<8x4xbf16>
      %c0_18 = arith.constant 0 : index
      %c0_19 = arith.constant 0 : index
      %c0_20 = arith.constant 0 : index
      %c0_21 = arith.constant 0 : index
      %22 = vector.load %arg7[%c0_18, %c0_19, %c0_20, %c0_21] : memref<1x8x8x4xbf16, #tpu.memory_space<vmem>>, vector<1x1x8x4xbf16>
      %23 = vector.shape_cast %22 : vector<1x1x8x4xbf16> to vector<8x4xbf16>
      %24 = vector.shape_cast %21 : vector<8x4xbf16> to vector<1x1x8x4xbf16>
      tpu.vector_store %arg7[%c0_18, %c0_19, %c0_20, %c0_21], %24 {strides = array<i32>} : memref<1x8x8x4xbf16, #tpu.memory_space<vmem>>, vector<1x1x8x4xbf16>,
      %25 = vector.extract_strided_slice %14 {offsets = [0, 64], sizes = [8, 4], strides = [1, 1]} : vector<8x96xf32> to vector<8x4xf32>
      %26 = arith.truncf %25 : vector<8x4xf32> to vector<8x4xbf16>
      %c0_22 = arith.constant 0 : index
      %c0_23 = arith.constant 0 : index
      %c0_24 = arith.constant 0 : index
      %c0_25 = arith.constant 0 : index
      %27 = vector.load %arg8[%c0_22, %c0_23, %c0_24, %c0_25] : memref<1x8x8x4xbf16, #tpu.memory_space<vmem>>, vector<1x1x8x4xbf16>
      %28 = vector.shape_cast %27 : vector<1x1x8x4xbf16> to vector<8x4xbf16>
      %29 = vector.shape_cast %26 : vector<8x4xbf16> to vector<1x1x8x4xbf16>
      tpu.vector_store %arg8[%c0_22, %c0_23, %c0_24, %c0_25], %29 {strides = array<i32>} : memref<1x8x8x4xbf16, #tpu.memory_space<vmem>>, vector<1x1x8x4xbf16>,
      %30 = vector.extract_strided_slice %14 {offsets = [0, 4], sizes = [8, 4], strides = [1, 1]} : vector<8x96xf32> to vector<8x4xf32>
      %31 = arith.truncf %30 : vector<8x4xf32> to vector<8x4xbf16>
      %c0_26 = arith.constant 0 : index
      %c1 = arith.constant 1 : index
      %c0_27 = arith.constant 0 : index
      %c0_28 = arith.constant 0 : index
      %32 = vector.load %arg6[%c0_26, %c1, %c0_27, %c0_28] : memref<1x8x8x4xbf16, #tpu.memory_space<vmem>>, vector<1x1x8x4xbf16>
      %33 = vector.shape_cast %32 : vector<1x1x8x4xbf16> to vector<8x4xbf16>
      %34 = vector.shape_cast %31 : vector<8x4xbf16> to vector<1x1x8x4xbf16>
      tpu.vector_store %arg6[%c0_26, %c1, %c0_27, %c0_28], %34 {strides = array<i32>} : memref<1x8x8x4xbf16, #tpu.memory_space<vmem>>, vector<1x1x8x4xbf16>,
      %35 = vector.extract_strided_slice %14 {offsets = [0, 36], sizes = [8, 4], strides = [1, 1]} : vector<8x96xf32> to vector<8x4xf32>
      %36 = arith.truncf %35 : vector<8x4xf32> to vector<8x4xbf16>
      %c0_29 = arith.constant 0 : index
      %c1_30 = arith.constant 1 : index
      %c0_31 = arith.constant 0 : index
      %c0_32 = arith.constant 0 : index
      %37 = vector.load %arg7[%c0_29, %c1_30, %c0_31, %c0_32] : memref<1x8x8x4xbf16, #tpu.memory_space<vmem>>, vector<1x1x8x4xbf16>
      %38 = vector.shape_cast %37 : vector<1x1x8x4xbf16> to vector<8x4xbf16>
      %39 = vector.shape_cast %36 : vector<8x4xbf16> to vector<1x1x8x4xbf16>
      tpu.vector_store %arg7[%c0_29, %c1_30, %c0_31, %c0_32], %39 {strides = array<i32>} : memref<1x8x8x4xbf16, #tpu.memory_space<vmem>>, vector<1x1x8x4xbf16>,
      %40 = vector.extract_strided_slice %14 {offsets = [0, 68], sizes = [8, 4], strides = [1, 1]} : vector<8x96xf32> to vector<8x4xf32>
      %41 = arith.truncf %40 : vector<8x4xf32> to vector<8x4xbf16>
      %c0_33 = arith.constant 0 : index
      %c1_34 = arith.constant 1 : index
      %c0_35 = arith.constant 0 : index
      %c0_36 = arith.constant 0 : index
      %42 = vector.load %arg8[%c0_33, %c1_34, %c0_35, %c0_36] : memref<1x8x8x4xbf16, #tpu.memory_space<vmem>>, vector<1x1x8x4xbf16>
      %43 = vector.shape_cast %42 : vector<1x1x8x4xbf16> to vector<8x4xbf16>
      %44 = vector.shape_cast %41 : vector<8x4xbf16> to vector<1x1x8x4xbf16>
      tpu.vector_store %arg8[%c0_33, %c1_34, %c0_35, %c0_36], %44 {strides = array<i32>} : memref<1x8x8x4xbf16, #tpu.memory_space<vmem>>, vector<1x1x8x4xbf16>,
      %45 = vector.extract_strided_slice %14 {offsets = [0, 8], sizes = [8, 4], strides = [1, 1]} : vector<8x96xf32> to vector<8x4xf32>
      %46 = arith.truncf %45 : vector<8x4xf32> to vector<8x4xbf16>
      %c0_37 = arith.constant 0 : index
      %c2 = arith.constant 2 : index
      %c0_38 = arith.constant 0 : index
      %c0_39 = arith.constant 0 : index
      %47 = vector.load %arg6[%c0_37, %c2, %c0_38, %c0_39] : memref<1x8x8x4xbf16, #tpu.memory_space<vmem>>, vector<1x1x8x4xbf16>
      %48 = vector.shape_cast %47 : vector<1x1x8x4xbf16> to vector<8x4xbf16>
      %49 = vector.shape_cast %46 : vector<8x4xbf16> to vector<1x1x8x4xbf16>
      tpu.vector_store %arg6[%c0_37, %c2, %c0_38, %c0_39], %49 {strides = array<i32>} : memref<1x8x8x4xbf16, #tpu.memory_space<vmem>>, vector<1x1x8x4xbf16>,
      %50 = vector.extract_strided_slice %14 {offsets = [0, 40], sizes = [8, 4], strides = [1, 1]} : vector<8x96xf32> to vector<8x4xf32>
      %51 = arith.truncf %50 : vector<8x4xf32> to vector<8x4xbf16>
      %c0_40 = arith.constant 0 : index
      %c2_41 = arith.constant 2 : index
      %c0_42 = arith.constant 0 : index
      %c0_43 = arith.constant 0 : index
      %52 = vector.load %arg7[%c0_40, %c2_41, %c0_42, %c0_43] : memref<1x8x8x4xbf16, #tpu.memory_space<vmem>>, vector<1x1x8x4xbf16>
      %53 = vector.shape_cast %52 : vector<1x1x8x4xbf16> to vector<8x4xbf16>
      %54 = vector.shape_cast %51 : vector<8x4xbf16> to vector<1x1x8x4xbf16>
      tpu.vector_store %arg7[%c0_40, %c2_41, %c0_42, %c0_43], %54 {strides = array<i32>} : memref<1x8x8x4xbf16, #tpu.memory_space<vmem>>, vector<1x1x8x4xbf16>,
      %55 = vector.extract_strided_slice %14 {offsets = [0, 72], sizes = [8, 4], strides = [1, 1]} : vector<8x96xf32> to vector<8x4xf32>
      %56 = arith.truncf %55 : vector<8x4xf32> to vector<8x4xbf16>
      %c0_44 = arith.constant 0 : index
      %c2_45 = arith.constant 2 : index
      %c0_46 = arith.constant 0 : index
      %c0_47 = arith.constant 0 : index
      %57 = vector.load %arg8[%c0_44, %c2_45, %c0_46, %c0_47] : memref<1x8x8x4xbf16, #tpu.memory_space<vmem>>, vector<1x1x8x4xbf16>
      %58 = vector.shape_cast %57 : vector<1x1x8x4xbf16> to vector<8x4xbf16>
      %59 = vector.shape_cast %56 : vector<8x4xbf16> to vector<1x1x8x4xbf16>
      tpu.vector_store %arg8[%c0_44, %c2_45, %c0_46, %c0_47], %59 {strides = array<i32>} : memref<1x8x8x4xbf16, #tpu.memory_space<vmem>>, vector<1x1x8x4xbf16>,
      %60 = vector.extract_strided_slice %14 {offsets = [0, 12], sizes = [8, 4], strides = [1, 1]} : vector<8x96xf32> to vector<8x4xf32>
      %61 = arith.truncf %60 : vector<8x4xf32> to vector<8x4xbf16>
      %c0_48 = arith.constant 0 : index
      %c3 = arith.constant 3 : index
      %c0_49 = arith.constant 0 : index
      %c0_50 = arith.constant 0 : index
      %62 = vector.load %arg6[%c0_48, %c3, %c0_49, %c0_50] : memref<1x8x8x4xbf16, #tpu.memory_space<vmem>>, vector<1x1x8x4xbf16>
      %63 = vector.shape_cast %62 : vector<1x1x8x4xbf16> to vector<8x4xbf16>
      %64 = vector.shape_cast %61 : vector<8x4xbf16> to vector<1x1x8x4xbf16>
      tpu.vector_store %arg6[%c0_48, %c3, %c0_49, %c0_50], %64 {strides = array<i32>} : memref<1x8x8x4xbf16, #tpu.memory_space<vmem>>, vector<1x1x8x4xbf16>,
      %65 = vector.extract_strided_slice %14 {offsets = [0, 44], sizes = [8, 4], strides = [1, 1]} : vector<8x96xf32> to vector<8x4xf32>
      %66 = arith.truncf %65 : vector<8x4xf32> to vector<8x4xbf16>
      %c0_51 = arith.constant 0 : index
      %c3_52 = arith.constant 3 : index
      %c0_53 = arith.constant 0 : index
      %c0_54 = arith.constant 0 : index
      %67 = vector.load %arg7[%c0_51, %c3_52, %c0_53, %c0_54] : memref<1x8x8x4xbf16, #tpu.memory_space<vmem>>, vector<1x1x8x4xbf16>
      %68 = vector.shape_cast %67 : vector<1x1x8x4xbf16> to vector<8x4xbf16>
      %69 = vector.shape_cast %66 : vector<8x4xbf16> to vector<1x1x8x4xbf16>
      tpu.vector_store %arg7[%c0_51, %c3_52, %c0_53, %c0_54], %69 {strides = array<i32>} : memref<1x8x8x4xbf16, #tpu.memory_space<vmem>>, vector<1x1x8x4xbf16>,
      %70 = vector.extract_strided_slice %14 {offsets = [0, 76], sizes = [8, 4], strides = [1, 1]} : vector<8x96xf32> to vector<8x4xf32>
      %71 = arith.truncf %70 : vector<8x4xf32> to vector<8x4xbf16>
      %c0_55 = arith.constant 0 : index
      %c3_56 = arith.constant 3 : index
      %c0_57 = arith.constant 0 : index
      %c0_58 = arith.constant 0 : index
      %72 = vector.load %arg8[%c0_55, %c3_56, %c0_57, %c0_58] : memref<1x8x8x4xbf16, #tpu.memory_space<vmem>>, vector<1x1x8x4xbf16>
      %73 = vector.shape_cast %72 : vector<1x1x8x4xbf16> to vector<8x4xbf16>
      %74 = vector.shape_cast %71 : vector<8x4xbf16> to vector<1x1x8x4xbf16>
      tpu.vector_store %arg8[%c0_55, %c3_56, %c0_57, %c0_58], %74 {strides = array<i32>} : memref<1x8x8x4xbf16, #tpu.memory_space<vmem>>, vector<1x1x8x4xbf16>,
      %75 = vector.extract_strided_slice %14 {offsets = [0, 16], sizes = [8, 4], strides = [1, 1]} : vector<8x96xf32> to vector<8x4xf32>
      %76 = arith.truncf %75 : vector<8x4xf32> to vector<8x4xbf16>
      %c0_59 = arith.constant 0 : index
      %c4 = arith.constant 4 : index
      %c0_60 = arith.constant 0 : index
      %c0_61 = arith.constant 0 : index
      %77 = vector.load %arg6[%c0_59, %c4, %c0_60, %c0_61] : memref<1x8x8x4xbf16, #tpu.memory_space<vmem>>, vector<1x1x8x4xbf16>
      %78 = vector.shape_cast %77 : vector<1x1x8x4xbf16> to vector<8x4xbf16>
      %79 = vector.shape_cast %76 : vector<8x4xbf16> to vector<1x1x8x4xbf16>
      tpu.vector_store %arg6[%c0_59, %c4, %c0_60, %c0_61], %79 {strides = array<i32>} : memref<1x8x8x4xbf16, #tpu.memory_space<vmem>>, vector<1x1x8x4xbf16>,
      %80 = vector.extract_strided_slice %14 {offsets = [0, 48], sizes = [8, 4], strides = [1, 1]} : vector<8x96xf32> to vector<8x4xf32>
      %81 = arith.truncf %80 : vector<8x4xf32> to vector<8x4xbf16>
      %c0_62 = arith.constant 0 : index
      %c4_63 = arith.constant 4 : index
      %c0_64 = arith.constant 0 : index
      %c0_65 = arith.constant 0 : index
      %82 = vector.load %arg7[%c0_62, %c4_63, %c0_64, %c0_65] : memref<1x8x8x4xbf16, #tpu.memory_space<vmem>>, vector<1x1x8x4xbf16>
      %83 = vector.shape_cast %82 : vector<1x1x8x4xbf16> to vector<8x4xbf16>
      %84 = vector.shape_cast %81 : vector<8x4xbf16> to vector<1x1x8x4xbf16>
      tpu.vector_store %arg7[%c0_62, %c4_63, %c0_64, %c0_65], %84 {strides = array<i32>} : memref<1x8x8x4xbf16, #tpu.memory_space<vmem>>, vector<1x1x8x4xbf16>,
      %85 = vector.extract_strided_slice %14 {offsets = [0, 80], sizes = [8, 4], strides = [1, 1]} : vector<8x96xf32> to vector<8x4xf32>
      %86 = arith.truncf %85 : vector<8x4xf32> to vector<8x4xbf16>
      %c0_66 = arith.constant 0 : index
      %c4_67 = arith.constant 4 : index
      %c0_68 = arith.constant 0 : index
      %c0_69 = arith.constant 0 : index
      %87 = vector.load %arg8[%c0_66, %c4_67, %c0_68, %c0_69] : memref<1x8x8x4xbf16, #tpu.memory_space<vmem>>, vector<1x1x8x4xbf16>
      %88 = vector.shape_cast %87 : vector<1x1x8x4xbf16> to vector<8x4xbf16>
      %89 = vector.shape_cast %86 : vector<8x4xbf16> to vector<1x1x8x4xbf16>
      tpu.vector_store %arg8[%c0_66, %c4_67, %c0_68, %c0_69], %89 {strides = array<i32>} : memref<1x8x8x4xbf16, #tpu.memory_space<vmem>>, vector<1x1x8x4xbf16>,
      %90 = vector.extract_strided_slice %14 {offsets = [0, 20], sizes = [8, 4], strides = [1, 1]} : vector<8x96xf32> to vector<8x4xf32>
      %91 = arith.truncf %90 : vector<8x4xf32> to vector<8x4xbf16>
      %c0_70 = arith.constant 0 : index
      %c5 = arith.constant 5 : index
      %c0_71 = arith.constant 0 : index
      %c0_72 = arith.constant 0 : index
      %92 = vector.load %arg6[%c0_70, %c5, %c0_71, %c0_72] : memref<1x8x8x4xbf16, #tpu.memory_space<vmem>>, vector<1x1x8x4xbf16>
      %93 = vector.shape_cast %92 : vector<1x1x8x4xbf16> to vector<8x4xbf16>
      %94 = vector.shape_cast %91 : vector<8x4xbf16> to vector<1x1x8x4xbf16>
      tpu.vector_store %arg6[%c0_70, %c5, %c0_71, %c0_72], %94 {strides = array<i32>} : memref<1x8x8x4xbf16, #tpu.memory_space<vmem>>, vector<1x1x8x4xbf16>,
      %95 = vector.extract_strided_slice %14 {offsets = [0, 52], sizes = [8, 4], strides = [1, 1]} : vector<8x96xf32> to vector<8x4xf32>
      %96 = arith.truncf %95 : vector<8x4xf32> to vector<8x4xbf16>
      %c0_73 = arith.constant 0 : index
      %c5_74 = arith.constant 5 : index
      %c0_75 = arith.constant 0 : index
      %c0_76 = arith.constant 0 : index
      %97 = vector.load %arg7[%c0_73, %c5_74, %c0_75, %c0_76] : memref<1x8x8x4xbf16, #tpu.memory_space<vmem>>, vector<1x1x8x4xbf16>
      %98 = vector.shape_cast %97 : vector<1x1x8x4xbf16> to vector<8x4xbf16>
      %99 = vector.shape_cast %96 : vector<8x4xbf16> to vector<1x1x8x4xbf16>
      tpu.vector_store %arg7[%c0_73, %c5_74, %c0_75, %c0_76], %99 {strides = array<i32>} : memref<1x8x8x4xbf16, #tpu.memory_space<vmem>>, vector<1x1x8x4xbf16>,
      %100 = vector.extract_strided_slice %14 {offsets = [0, 84], sizes = [8, 4], strides = [1, 1]} : vector<8x96xf32> to vector<8x4xf32>
      %101 = arith.truncf %100 : vector<8x4xf32> to vector<8x4xbf16>
      %c0_77 = arith.constant 0 : index
      %c5_78 = arith.constant 5 : index
      %c0_79 = arith.constant 0 : index
      %c0_80 = arith.constant 0 : index
      %102 = vector.load %arg8[%c0_77, %c5_78, %c0_79, %c0_80] : memref<1x8x8x4xbf16, #tpu.memory_space<vmem>>, vector<1x1x8x4xbf16>
      %103 = vector.shape_cast %102 : vector<1x1x8x4xbf16> to vector<8x4xbf16>
      %104 = vector.shape_cast %101 : vector<8x4xbf16> to vector<1x1x8x4xbf16>
      tpu.vector_store %arg8[%c0_77, %c5_78, %c0_79, %c0_80], %104 {strides = array<i32>} : memref<1x8x8x4xbf16, #tpu.memory_space<vmem>>, vector<1x1x8x4xbf16>,
      %105 = vector.extract_strided_slice %14 {offsets = [0, 24], sizes = [8, 4], strides = [1, 1]} : vector<8x96xf32> to vector<8x4xf32>
      %106 = arith.truncf %105 : vector<8x4xf32> to vector<8x4xbf16>
      %c0_81 = arith.constant 0 : index
      %c6 = arith.constant 6 : index
      %c0_82 = arith.constant 0 : index
      %c0_83 = arith.constant 0 : index
      %107 = vector.load %arg6[%c0_81, %c6, %c0_82, %c0_83] : memref<1x8x8x4xbf16, #tpu.memory_space<vmem>>, vector<1x1x8x4xbf16>
      %108 = vector.shape_cast %107 : vector<1x1x8x4xbf16> to vector<8x4xbf16>
      %109 = vector.shape_cast %106 : vector<8x4xbf16> to vector<1x1x8x4xbf16>
      tpu.vector_store %arg6[%c0_81, %c6, %c0_82, %c0_83], %109 {strides = array<i32>} : memref<1x8x8x4xbf16, #tpu.memory_space<vmem>>, vector<1x1x8x4xbf16>,
      %110 = vector.extract_strided_slice %14 {offsets = [0, 56], sizes = [8, 4], strides = [1, 1]} : vector<8x96xf32> to vector<8x4xf32>
      %111 = arith.truncf %110 : vector<8x4xf32> to vector<8x4xbf16>
      %c0_84 = arith.constant 0 : index
      %c6_85 = arith.constant 6 : index
      %c0_86 = arith.constant 0 : index
      %c0_87 = arith.constant 0 : index
      %112 = vector.load %arg7[%c0_84, %c6_85, %c0_86, %c0_87] : memref<1x8x8x4xbf16, #tpu.memory_space<vmem>>, vector<1x1x8x4xbf16>
      %113 = vector.shape_cast %112 : vector<1x1x8x4xbf16> to vector<8x4xbf16>
      %114 = vector.shape_cast %111 : vector<8x4xbf16> to vector<1x1x8x4xbf16>
      tpu.vector_store %arg7[%c0_84, %c6_85, %c0_86, %c0_87], %114 {strides = array<i32>} : memref<1x8x8x4xbf16, #tpu.memory_space<vmem>>, vector<1x1x8x4xbf16>,
      %115 = vector.extract_strided_slice %14 {offsets = [0, 88], sizes = [8, 4], strides = [1, 1]} : vector<8x96xf32> to vector<8x4xf32>
      %116 = arith.truncf %115 : vector<8x4xf32> to vector<8x4xbf16>
      %c0_88 = arith.constant 0 : index
      %c6_89 = arith.constant 6 : index
      %c0_90 = arith.constant 0 : index
      %c0_91 = arith.constant 0 : index
      %117 = vector.load %arg8[%c0_88, %c6_89, %c0_90, %c0_91] : memref<1x8x8x4xbf16, #tpu.memory_space<vmem>>, vector<1x1x8x4xbf16>
      %118 = vector.shape_cast %117 : vector<1x1x8x4xbf16> to vector<8x4xbf16>
      %119 = vector.shape_cast %116 : vector<8x4xbf16> to vector<1x1x8x4xbf16>
      tpu.vector_store %arg8[%c0_88, %c6_89, %c0_90, %c0_91], %119 {strides = array<i32>} : memref<1x8x8x4xbf16, #tpu.memory_space<vmem>>, vector<1x1x8x4xbf16>,
      %120 = vector.extract_strided_slice %14 {offsets = [0, 28], sizes = [8, 4], strides = [1, 1]} : vector<8x96xf32> to vector<8x4xf32>
      %121 = arith.truncf %120 : vector<8x4xf32> to vector<8x4xbf16>
      %c0_92 = arith.constant 0 : index
      %c7 = arith.constant 7 : index
      %c0_93 = arith.constant 0 : index
      %c0_94 = arith.constant 0 : index
      %122 = vector.load %arg6[%c0_92, %c7, %c0_93, %c0_94] : memref<1x8x8x4xbf16, #tpu.memory_space<vmem>>, vector<1x1x8x4xbf16>
      %123 = vector.shape_cast %122 : vector<1x1x8x4xbf16> to vector<8x4xbf16>
      %124 = vector.shape_cast %121 : vector<8x4xbf16> to vector<1x1x8x4xbf16>
      tpu.vector_store %arg6[%c0_92, %c7, %c0_93, %c0_94], %124 {strides = array<i32>} : memref<1x8x8x4xbf16, #tpu.memory_space<vmem>>, vector<1x1x8x4xbf16>,
      %125 = vector.extract_strided_slice %14 {offsets = [0, 60], sizes = [8, 4], strides = [1, 1]} : vector<8x96xf32> to vector<8x4xf32>
      %126 = arith.truncf %125 : vector<8x4xf32> to vector<8x4xbf16>
      %c0_95 = arith.constant 0 : index
      %c7_96 = arith.constant 7 : index
      %c0_97 = arith.constant 0 : index
      %c0_98 = arith.constant 0 : index
      %127 = vector.load %arg7[%c0_95, %c7_96, %c0_97, %c0_98] : memref<1x8x8x4xbf16, #tpu.memory_space<vmem>>, vector<1x1x8x4xbf16>
      %128 = vector.shape_cast %127 : vector<1x1x8x4xbf16> to vector<8x4xbf16>
      %129 = vector.shape_cast %126 : vector<8x4xbf16> to vector<1x1x8x4xbf16>
      tpu.vector_store %arg7[%c0_95, %c7_96, %c0_97, %c0_98], %129 {strides = array<i32>} : memref<1x8x8x4xbf16, #tpu.memory_space<vmem>>, vector<1x1x8x4xbf16>,
      %130 = vector.extract_strided_slice %14 {offsets = [0, 92], sizes = [8, 4], strides = [1, 1]} : vector<8x96xf32> to vector<8x4xf32>
      %131 = arith.truncf %130 : vector<8x4xf32> to vector<8x4xbf16>
      %c0_99 = arith.constant 0 : index
      %c7_100 = arith.constant 7 : index
      %c0_101 = arith.constant 0 : index
      %c0_102 = arith.constant 0 : index
      %132 = vector.load %arg8[%c0_99, %c7_100, %c0_101, %c0_102] : memref<1x8x8x4xbf16, #tpu.memory_space<vmem>>, vector<1x1x8x4xbf16>
      %133 = vector.shape_cast %132 : vector<1x1x8x4xbf16> to vector<8x4xbf16>
      %134 = vector.shape_cast %131 : vector<8x4xbf16> to vector<1x1x8x4xbf16>
      tpu.vector_store %arg8[%c0_99, %c7_100, %c0_101, %c0_102], %134 {strides = array<i32>} : memref<1x8x8x4xbf16, #tpu.memory_space<vmem>>, vector<1x1x8x4xbf16>,
    } else {
    }
    return
  }
  func.func @transform_0(%arg0: i32, %arg1: i32, %arg2: i32, %arg3: i32) -> (i32, i32, i32) {
    %c0_i32 = arith.constant 0 : i32
    return %arg0, %arg1, %arg3 : i32, i32, i32
  }
  func.func @transform_1(%arg0: i32, %arg1: i32, %arg2: i32, %arg3: i32) -> (i32, i32, i32) {
    %c0_i32 = arith.constant 0 : i32
    %c0_i32_0 = arith.constant 0 : i32
    return %arg2, %c0_i32, %arg3 : i32, i32, i32
  }
  func.func @transform_2(%arg0: i32, %arg1: i32, %arg2: i32, %arg3: i32) -> (i32, i32, i32, i32) {
    %c0_i32 = arith.constant 0 : i32
    %c0_i32_0 = arith.constant 0 : i32
    return %arg0, %arg2, %arg1, %c0_i32 : i32, i32, i32, i32
  }
  func.func @transform_3(%arg0: i32, %arg1: i32, %arg2: i32, %arg3: i32) -> (i32, i32, i32, i32) {
    %c0_i32 = arith.constant 0 : i32
    %c0_i32_0 = arith.constant 0 : i32
    return %arg0, %arg2, %arg1, %c0_i32 : i32, i32, i32, i32
  }
  func.func @transform_4(%arg0: i32, %arg1: i32, %arg2: i32, %arg3: i32) -> (i32, i32, i32, i32) {
    %c0_i32 = arith.constant 0 : i32
    %c0_i32_0 = arith.constant 0 : i32
    return %arg0, %arg2, %arg1, %c0_i32 : i32, i32, i32, i32
  }
}

</mosaic_0001>

<llo_original>
// kernel: tpu_custom_call.1
$region0: #{tpu_custom_call.1}
  #allocation0 [shape = 'u32[]', space=smem, size = 0x4, offset = 0x4, fixed_abs, tag = 'smem constant byte address 0x4 - core index']
  #allocation1 [shape = 'u32[144,128]{1,0:T(1,128)}', space=vmem, size = 0x12000, scoped, tag = 'internal scratch']
  #allocation2 [shape = 'f32[8,96]{1,0:T(8,128)}', space=vmem, size = 0x1000, scoped, tag = 'scratch operand']
  %s0 = inlined_call_operand.hbm [shape: bf16[2,8,32], index: 0, kind: input, shape index: {}]
  %s1 = inlined_call_operand.hbm [shape: bf16[1,96,32], index: 1, kind: input, shape index: {}]
  %s2 = inlined_call_operand.hbm [shape: bf16[2,8,8,4], index: 2, kind: output, shape index: {0}]
  %s3 = inlined_call_operand.hbm [shape: bf16[2,8,8,4], index: 3, kind: output, shape index: {1}]
  %s4 = inlined_call_operand.hbm [shape: bf16[2,8,8,4], index: 4, kind: output, shape index: {2}]
  %5 = xla_tuple %s2, %s3, %s4
  %s6 = sld [smem:[#allocation0]]
  $region73: #{tpu_custom_call.1} parent=0
    _
  %s8 = ssub.s32 1, %s6
  %s9 = scalar_select 0, %s8, %s6
  $region1: #{tpu_custom_call.1} parent=0
    #allocation3 [shape = 'u8[4096]{0}', space=vmem, size = 0x1000, scoped, tag = 'input window, operand 0']
    #allocation4 [shape = 's32[2]{0}', space=sflag, size = 0x8, scoped, tag = 'scoped memory for tpu_custom_call.1']
    #allocation5 [shape = 's32[2]{0}', space=sflag, size = 0x8, scoped, tag = 'scoped memory for tpu_custom_call.1']
    #allocation6 [shape = 'u8[24576]{0}', space=vmem, size = 0x6000, scoped, tag = 'input window, operand 1, single buffered']
    #allocation7 [shape = 's32[1]{0}', space=sflag, size = 0x4, scoped, tag = 'scoped memory for tpu_custom_call.1']
    #allocation8 [shape = 'u8[32768]{0}', space=vmem, size = 0x8000, scoped, tag = 'output window, operand 0']
    #allocation9 [shape = 'u8[32768]{0}', space=vmem, size = 0x8000, scoped, tag = 'output window, operand 1']
    #allocation10 [shape = 's32[2]{0}', space=sflag, size = 0x8, scoped, tag = 'scoped memory for tpu_custom_call.1']
    #allocation11 [shape = 'u8[32768]{0}', space=vmem, size = 0x8000, scoped, tag = 'output window, operand 2']
    %10 = vsyncpa [#allocation4], 0
    %s11 = scalar_lea.sflag [#allocation4], 1
    %12 = vsyncpa %s11, 0
    %13 = vsyncpa [#allocation7], 0
    %14 = vsyncpa [#allocation5], 0
    %s15 = scalar_lea.sflag [#allocation5], 1
    %16 = vsyncpa %s15, 0
    %17 = vsyncpa [#allocation10], 0
    %s18 = scalar_lea.sflag [#allocation10], 1
    %19 = vsyncpa %s18, 0
    loop: start=0, step=1, limit=4
    $region2: #{tpu_custom_call.1} parent=1 // loop_pre_header
      _
    $region3: #{tpu_custom_call.1} parent=1 // loop_header
      %s21 = sphi 0, %s25
      %p22 = scmp.ge.s32.totalorder %s21, 4
      %s28 = sphi 0, %s54
      %s29 = sphi 0, %s50
      %s30 = sphi 0, %s46
      %s31 = sphi 0, %s42
      %s32 = sphi 0, %s28
      %s33 = sphi 0, %s29
      %s34 = sphi 0, %s30
      %s35 = sphi 0, %s31
      %s36 = sphi 0, %s32
      %s37 = sphi 0, %s33
      %s38 = sphi 0, %s34
      %s39 = sphi 0, %s35
      %s61 = sphi 0, %s63
      %s64 = sphi 0, %s61
      %s65 = sphi 0, %s64
      %s81 = sphi 0, %s65
      %s89 = sphi 0, %s91
      %s92 = sphi 0, %s89
      %s93 = sphi 0, %s92
      %s109 = sphi 0, %s93
      %s119 = sphi 0, %s121
      %s122 = sphi 0, %s119
      %s123 = sphi 0, %s122
      %s139 = sphi 0, %s123
      %s149 = sphi 0, %s151
      %s152 = sphi 0, %s149
      %s153 = sphi 0, %s152
      %s169 = sphi 0, %s153
      %s179 = sphi 0, %s181
      %s182 = sphi 0, %s179
      %s183 = sphi 0, %s182
      %s199 = sphi 0, %s183
    $region4: #{tpu_custom_call.1} parent=1 // loop_header_branch
      %24 = sbr.rel (%p22) target = $region8
    $region5: #{tpu_custom_call.1} parent=1 // loop_body
      %s26 = ssub.s32 %s21, 1
      %s27 = ssub.s32 %s21, 2
      %s40 = sadd.s32 1, %s31
      %p41 = scmp.ge.s32.totalorder %s40, 1
      %s42 = scalar_select %p41, 0, %s40
      %s43 = sadd.s32 1, %s30
      %s44 = scalar_select %p41, %s43, %s30
      %p45 = scmp.ge.s32.totalorder %s44, 1
      %s46 = scalar_select %p45, 0, %s44
      %s47 = sadd.s32 1, %s29
      %s48 = scalar_select %p45, %s47, %s29
      %p49 = scmp.ge.s32.totalorder %s48, 1
      %s50 = scalar_select %p49, 0, %s48
      %s51 = sadd.s32 1, %s28
      %s52 = scalar_select %p49, %s51, %s28
      %p53 = scmp.ge.s32.totalorder %s52, 2
      %s54 = scalar_select %p53, 0, %s52
      %s55 = ssub.s32 %s28, %s54
      %s56 = ssub.s32 %s29, %s50
      %s57 = sor.u32 %s55, %s56
      %s58 = ssub.s32 %s31, %s42
      %s59 = sor.u32 %s57, %s58
      %p60 = scmp.eq.s32.totalorder %s59, 0
      %s62 = sadd.s32 %s61, 1
      %s63 = scalar_select %p60, %s61, %s62
      %p66 = pneg %p60
      %p67 = scmp.eq.s32.totalorder %s21, 1
      %p68 = por %p66, %p67
      %p69 = scmp.ne.s32.totalorder %s61, %s64
      %p70 = scmp.eq.s32.totalorder %s21, 0
      %p71 = por %p69, %p70
      %p72 = scmp.ne.s32.totalorder %s61, %s64
      %p73 = scmp.eq.s32.totalorder %s26, 1
      %p74 = por %p72, %p73
      %p75 = scmp.ne.s32.totalorder %s64, %s65
      %p76 = scmp.eq.s32.totalorder %s26, 0
      %p77 = por %p75, %p76
      %p78 = scmp.ne.s32.totalorder %s64, %s65
      %p79 = scmp.eq.s32.totalorder %s27, 1
      %p80 = por %p78, %p79
      %p82 = scmp.ne.s32.totalorder %s65, %s81
      %p83 = scmp.eq.s32.totalorder %s27, 0
      %p84 = por %p82, %p83
      %s85 = ssub.s32 %s30, %s46
      %s86 = ssub.s32 %s31, %s42
      %s87 = sor.u32 %s85, %s86
      %p88 = scmp.eq.s32.totalorder %s87, 0
      %s90 = sadd.s32 %s89, 1
      %s91 = scalar_select %p88, %s89, %s90
      %p94 = pneg %p88
      %p95 = scmp.eq.s32.totalorder %s21, 1
      %p96 = por %p94, %p95
      %p97 = scmp.ne.s32.totalorder %s89, %s92
      %p98 = scmp.eq.s32.totalorder %s21, 0
      %p99 = por %p97, %p98
      %p100 = scmp.ne.s32.totalorder %s89, %s92
      %p101 = scmp.eq.s32.totalorder %s26, 1
      %p102 = por %p100, %p101
      %p103 = scmp.ne.s32.totalorder %s92, %s93
      %p104 = scmp.eq.s32.totalorder %s26, 0
      %p105 = por %p103, %p104
      %p106 = scmp.ne.s32.totalorder %s92, %s93
      %p107 = scmp.eq.s32.totalorder %s27, 1
      %p108 = por %p106, %p107
      %p110 = scmp.ne.s32.totalorder %s93, %s109
      %p111 = scmp.eq.s32.totalorder %s27, 0
      %p112 = por %p110, %p111
      %s113 = ssub.s32 %s28, %s54
      %s114 = ssub.s32 %s30, %s46
      %s115 = sor.u32 %s113, %s114
      %s116 = ssub.s32 %s29, %s50
      %s117 = sor.u32 %s115, %s116
      %p118 = scmp.eq.s32.totalorder %s117, 0
      %s120 = sadd.s32 %s119, 1
      %s121 = scalar_select %p118, %s119, %s120
      %p124 = pneg %p118
      %p125 = scmp.eq.s32.totalorder %s21, 1
      %p126 = por %p124, %p125
      %p127 = scmp.ne.s32.totalorder %s119, %s122
      %p128 = scmp.eq.s32.totalorder %s21, 0
      %p129 = por %p127, %p128
      %p130 = scmp.ne.s32.totalorder %s119, %s122
      %p131 = scmp.eq.s32.totalorder %s26, 1
      %p132 = por %p130, %p131
      %p133 = scmp.ne.s32.totalorder %s122, %s123
      %p134 = scmp.eq.s32.totalorder %s26, 0
      %p135 = por %p133, %p134
      %p136 = scmp.ne.s32.totalorder %s122, %s123
      %p137 = scmp.eq.s32.totalorder %s27, 1
      %p138 = por %p136, %p137
      %p140 = scmp.ne.s32.totalorder %s123, %s139
      %p141 = scmp.eq.s32.totalorder %s27, 0
      %p142 = por %p140, %p141
      %s143 = ssub.s32 %s28, %s54
      %s144 = ssub.s32 %s30, %s46
      %s145 = sor.u32 %s143, %s144
      %s146 = ssub.s32 %s29, %s50
      %s147 = sor.u32 %s145, %s146
      %p148 = scmp.eq.s32.totalorder %s147, 0
      %s150 = sadd.s32 %s149, 1
      %s151 = scalar_select %p148, %s149, %s150
      %p154 = pneg %p148
      %p155 = scmp.eq.s32.totalorder %s21, 1
      %p156 = por %p154, %p155
      %p157 = scmp.ne.s32.totalorder %s149, %s152
      %p158 = scmp.eq.s32.totalorder %s21, 0
      %p159 = por %p157, %p158
      %p160 = scmp.ne.s32.totalorder %s149, %s152
      %p161 = scmp.eq.s32.totalorder %s26, 1
      %p162 = por %p160, %p161
      %p163 = scmp.ne.s32.totalorder %s152, %s153
      %p164 = scmp.eq.s32.totalorder %s26, 0
      %p165 = por %p163, %p164
      %p166 = scmp.ne.s32.totalorder %s152, %s153
      %p167 = scmp.eq.s32.totalorder %s27, 1
      %p168 = por %p166, %p167
      %p170 = scmp.ne.s32.totalorder %s153, %s169
      %p171 = scmp.eq.s32.totalorder %s27, 0
      %p172 = por %p170, %p171
      %s173 = ssub.s32 %s28, %s54
      %s174 = ssub.s32 %s30, %s46
      %s175 = sor.u32 %s173, %s174
      %s176 = ssub.s32 %s29, %s50
      %s177 = sor.u32 %s175, %s176
      %p178 = scmp.eq.s32.totalorder %s177, 0
      %s180 = sadd.s32 %s179, 1
      %s181 = scalar_select %p178, %s179, %s180
      %p184 = pneg %p178
      %p185 = scmp.eq.s32.totalorder %s21, 1
      %p186 = por %p184, %p185
      %p187 = scmp.ne.s32.totalorder %s179, %s182
      %p188 = scmp.eq.s32.totalorder %s21, 0
      %p189 = por %p187, %p188
      %p190 = scmp.ne.s32.totalorder %s179, %s182
      %p191 = scmp.eq.s32.totalorder %s26, 1
      %p192 = por %p190, %p191
      %p193 = scmp.ne.s32.totalorder %s182, %s183
      %p194 = scmp.eq.s32.totalorder %s26, 0
      %p195 = por %p193, %p194
      %p196 = scmp.ne.s32.totalorder %s182, %s183
      %p197 = scmp.eq.s32.totalorder %s27, 1
      %p198 = por %p196, %p197
      %p200 = scmp.ne.s32.totalorder %s183, %s199
      %p201 = scmp.eq.s32.totalorder %s27, 0
      %p202 = por %p200, %p201
      %p203 = scmp.le.s32.totalorder 1, %s21
      %p204 = scmp.lt.s32.totalorder %s21, 3
      %p205 = pnand %p203, %p204
      %p206 = pneg %p205
      // Predicated region
      $region9: #{tpu_custom_call.1} parent=5 // pred_check
        _
      $region10: #{tpu_custom_call.1} parent=5 // pred_check_branch
        %208 = sbr.rel (%p205) target = $region12
      $region11: #{tpu_custom_call.1} parent=5 // pred_region
        %s209 = ssub.s32 %s21, 1
        // Predicated region
        $region13: #{tpu_custom_call.1} parent=11 // pred_check
          %p210 = pneg %p105
        $region14: #{tpu_custom_call.1} parent=11 // pred_check_branch
          %212 = sbr.rel (%p210) target = $region16
        $region15: #{tpu_custom_call.1} parent=11 // pred_region
          %s214 = ssub.s32 768, 768
          %215 = vsyncadd [#allocation7], %s214
          %s216 = smul.addr %s34, 12
          %s217 = sadd.s32 %s35, %s216
          %s218 = smul.addr %s217, 64
          %s219 = scalar_lea.hbm %s1, %s218
          %s220 = sshll.u32 [#allocation6], 4
          %s221 = int_to_ptr.vmem [resolvable:$true] %s220
          %226 = dma.hbm_to_vmem [thread:$0]  %s219, 768, %s221, [#allocation7], 64, 64, 4
        $region16: #{tpu_custom_call.1} parent=11 // pred_fallthru
          _
      $region12: #{tpu_custom_call.1} parent=5 // pred_fallthru
        _
      %p227 = scmp.lt.s32.totalorder %s21, 2
      // Predicated region
      $region17: #{tpu_custom_call.1} parent=5 // pred_check
        %p228 = pneg %p227
      $region18: #{tpu_custom_call.1} parent=5 // pred_check_branch
        %230 = sbr.rel (%p228) target = $region20
      $region19: #{tpu_custom_call.1} parent=5 // pred_region
        // Predicated region
        $region21: #{tpu_custom_call.1} parent=19 // pred_check
          %p231 = pneg %p71
        $region22: #{tpu_custom_call.1} parent=19 // pred_check_branch
          %233 = sbr.rel (%p231) target = $region24
        $region23: #{tpu_custom_call.1} parent=19 // pred_region
          %s234 = sand.u32 %s61, 1
          %s235 = scalar_lea.sflag [#allocation4], %s234
          %s236 = sand.u32 %s61, 1
          %s237 = smul.addr %s236, 4
          %s238 = scalar_lea.vmem [#allocation3], %s237
          %s240 = ssub.s32 64, 64
          %241 = vsyncadd %s235, %s240
          %s242 = sadd.s32 %s31, %s29
          %s243 = sadd.s32 %s242, %s28
          %s244 = smul.addr %s243, 64
          %s245 = scalar_lea.hbm %s0, %s244
          %s247 = sshll.u32 %s238, 4
          %s248 = int_to_ptr.vmem [resolvable:$true] %s247
          %250 = dma.hbm_to_vmem [thread:$0]  %s245, 64, %s248, %s235
        $region24: #{tpu_custom_call.1} parent=19 // pred_fallthru
          _
      $region20: #{tpu_custom_call.1} parent=5 // pred_fallthru
        _
      %p251 = scmp.le.s32.totalorder 1, %s21
      %p252 = scmp.lt.s32.totalorder %s21, 3
      %p253 = pnand %p251, %p252
      %p254 = pneg %p253
      // Predicated region
      $region25: #{tpu_custom_call.1} parent=5 // pred_check
        _
      $region26: #{tpu_custom_call.1} parent=5 // pred_check_branch
        %256 = sbr.rel (%p253) target = $region28
      $region27: #{tpu_custom_call.1} parent=5 // pred_region
        %s257 = ssub.s32 %s21, 1
        %s258 = sand.u32 %s64, 1
        %s259 = scalar_lea.sflag [#allocation4], %s258
        %s260 = sand.u32 %s64, 1
        %s261 = smul.addr %s260, 4
        %s262 = scalar_lea.vmem [#allocation3], %s261
        // Predicated region
        $region29: #{tpu_custom_call.1} parent=27 // pred_check
          %p263 = pneg %p77
        $region30: #{tpu_custom_call.1} parent=27 // pred_check_branch
          %265 = sbr.rel (%p263) target = $region32
        $region31: #{tpu_custom_call.1} parent=27 // pred_region
          %266 = dma.done %s259, 64
        $region32: #{tpu_custom_call.1} parent=27 // pred_fallthru
          _
        // Predicated region
        $region33: #{tpu_custom_call.1} parent=27 // pred_check
          %p267 = pneg %p105
        $region34: #{tpu_custom_call.1} parent=27 // pred_check_branch
          %269 = sbr.rel (%p267) target = $region36
        $region35: #{tpu_custom_call.1} parent=27 // pred_region
          %270 = dma.done [#allocation7], 768
        $region36: #{tpu_custom_call.1} parent=27 // pred_fallthru
          _
        %s271 = sand.u32 %s64, 1
        %s272 = scalar_lea.sflag [#allocation4], %s271
        %s273 = sand.u32 %s64, 1
        %s274 = smul.addr %s273, 4
        %s275 = scalar_lea.vmem [#allocation3], %s274
        %p276 = pneg %p77
        %p277 = pneg %p74
        %p278 = pneg %p105
        %p279 = pneg %p102
        %p280 = pneg %p135
        %p281 = pneg %p132
        %s282 = sand.u32 %s122, 1
        %s283 = scalar_lea.sflag [#allocation5], %s282
        %s284 = sand.u32 %s122, 1
        %s285 = smul.addr %s284, 32
        %s286 = scalar_lea.vmem [#allocation8], %s285
        %p287 = pneg %p165
        %p288 = pneg %p162
        %s289 = sand.u32 %s26, 1
        %s290 = scalar_lea.sflag [#allocation10], %s289
        %s291 = sand.u32 %s152, 1
        %s292 = smul.addr %s291, 32
        %s293 = scalar_lea.vmem [#allocation9], %s292
        %p294 = pneg %p195
        %p295 = pneg %p192
        %s296 = sand.u32 %s26, 1
        %s297 = scalar_lea.sflag [#allocation10], %s296
        %s298 = sand.u32 %s182, 1
        %s299 = smul.addr %s298, 32
        %s300 = scalar_lea.vmem [#allocation11], %s299
        %s301 = smul.u32 8, %s34
        %s302 = smul.u32 8, %s34
        %s303 = smul.u32 8, %s34
        %p305 = scmp.eq.s32.totalorder %s35, 0
        // Predicated region
        $region37: #{tpu_custom_call.1} parent=27 // pred_check
          %p306 = pneg %p305
        $region38: #{tpu_custom_call.1} parent=27 // pred_check_branch
          %308 = sbr.rel (%p306) target = $region40
        $region39: #{tpu_custom_call.1} parent=27 // pred_region
          %vm309 = vcmask 785408
          %310 = vst.msk [vmem:[#allocation2] sm:$0xff] %vm309, 0.0
        $region40: #{tpu_custom_call.1} parent=27 // pred_fallthru
          _
        %v311 = vld [vmem:[%s262] sm:$0xf]
        %v312 = vld [vmem:[#allocation6] sm:$0xf]
        %v313 = vld [vmem:[#allocation6 + $0x4] sm:$0xf]
        %v314 = vld [vmem:[#allocation6 + $0x8] sm:$0xf]
        %v315 = vld [vmem:[#allocation6 + $0xc] sm:$0xf]
        %v316 = vld [vmem:[#allocation6 + $0x10] sm:$0xf]
        %v317 = vld [vmem:[#allocation6 + $0x14] sm:$0xf]
        %v318 = vld [vmem:[#allocation6 + $0x18] sm:$0xf]
        %v319 = vld [vmem:[#allocation6 + $0x1c] sm:$0xf]
        %v320 = vld [vmem:[#allocation6 + $0x20] sm:$0xf]
        %v321 = vld [vmem:[#allocation6 + $0x24] sm:$0xf]
        %v322 = vld [vmem:[#allocation6 + $0x28] sm:$0xf]
        %v323 = vld [vmem:[#allocation6 + $0x2c] sm:$0xf]
        %v324 = vld [vmem:[#allocation2] sm:$0xff]
        %v337 = vunpack.c.l.b16 %v312
        %v338 = vunpack.c.l.b16 %v313
        %v339 = vunpack.c.l.b16 %v314
        %v340 = vunpack.c.l.b16 %v315
        %v341 = vunpack.c.l.b16 %v316
        %v342 = vunpack.c.l.b16 %v317
        %v343 = vunpack.c.l.b16 %v318
        %v344 = vunpack.c.l.b16 %v319
        %v345 = vunpack.c.l.b16 %v320
        %v346 = vunpack.c.l.b16 %v321
        %v347 = vunpack.c.l.b16 %v322
        %v348 = vunpack.c.l.b16 %v323
        %v349 = vpack.c.b16 %v338, %v337
        %v350 = vpack.c.b16 %v340, %v339
        %v351 = vpack.c.b16 %v342, %v341
        %v352 = vpack.c.b16 %v344, %v343
        %v353 = vpack.c.b16 %v346, %v345
        %v354 = vpack.c.b16 %v348, %v347
        %vm355 = vcmask 261120
        %v357 = vsel %vm355, %v311, 0
        %v360 = vsel %vm355, %v349, 0
        %v363 = vsel %vm355, %v350, 0
        %v366 = vsel %vm355, %v351, 0
        %v369 = vsel %vm355, %v352, 0
        %v372 = vsel %vm355, %v353, 0
        %v375 = vsel %vm355, %v354, 0
        %377 = vmatprep.subr.bf16.mxu0 0
        %378 = vmatpush1.bf16.xpose.msra.mxu0 %v360
        %379 = vmatprep.subr.bf16.mxu0 0
        %380 = vmatpush1.bf16.xpose.msra.mxu0 %v363
        %381 = vmatprep.subr.bf16.mxu0 0
        %382 = vmatpush1.bf16.xpose.msra.mxu0 %v366
        %383 = vmatprep.subr.bf16.mxu0 0
        %384 = vmatpush1.bf16.xpose.msra.mxu0 %v369
        %385 = vmatprep.subr.bf16.mxu0 0
        %386 = vmatpush1.bf16.xpose.msra.mxu0 %v372
        %387 = vmatprep.subr.bf16.mxu0 0
        %388 = vmatpush1.bf16.xpose.msra.mxu0 %v375
        %389 = vmatprep.subr.bf16.mxu0 0
        %390 = vmatpush1.bf16.xpose.msra.mxu0 0
        %391 = vmatprep.subr.bf16.mxu0 0
        %392 = vmatpush1.bf16.xpose.msra.mxu0 0
        %393 = vmatprep.subr.bf16.mxu0 0
        %394 = vmatpush1.bf16.xpose.msra.mxu0 0
        %395 = vmatprep.subr.bf16.mxu0 0
        %396 = vmatpush1.bf16.xpose.msra.mxu0 0
        %397 = vmatprep.subr.bf16.mxu0 0
        %398 = vmatpush1.bf16.xpose.msra.mxu0 0
        %399 = vmatprep.subr.bf16.mxu0 0
        %400 = vmatpush1.bf16.xpose.msra.mxu0 0
        %401 = vmatprep.subr.bf16.mxu0 0
        %402 = vmatpush1.bf16.xpose.msra.mxu0 0
        %403 = vmatprep.subr.bf16.mxu0 0
        %404 = vmatpush1.bf16.xpose.msra.mxu0 0
        %405 = vmatprep.subr.bf16.mxu0 0
        %406 = vmatpush1.bf16.xpose.msra.mxu0 0
        %407 = vmatprep.subr.bf16.mxu0 0
        %408 = vmatpush1.bf16.xpose.msra.mxu0 0
        %409 = vmatprep.mubr.bf16.mxu0 0
        %410 = vmatmul.mubr.bf16.gmra.mrb[0].mxu0 %v357
        %v411 = vpop.f32.mrb[0].mxu0
        %v412 = vadd.f32 0.0, %v411
        %v413 = vpop.f32.mrb[0].mxu0
        %v414 = vpop.f32.mrb[0].mxu0
        %v415 = vpop.f32.mrb[0].mxu0
        %416 = vdwg.mxu0
        %v417 = vadd.f32 %v324, %v412
        %vm418 = vcmask 785408
        %419 = vst.msk [vmem:[#allocation2] sm:$0xff] %vm418, %v417
        // Predicated region
        $region41: #{tpu_custom_call.1} parent=27 // pred_check
          %p420 = pneg %p305
        $region42: #{tpu_custom_call.1} parent=27 // pred_check_branch
          %422 = sbr.rel (%p420) target = $region44
        $region43: #{tpu_custom_call.1} parent=27 // pred_region
          %v423 = vld [vmem:[#allocation2] sm:$0xff]
          %v424 = vpack.c.bf16 %v423, %v423
          %vm425 = vcmask 27648
          %426 = vst.msk [vmem:[%s286] sm:$0xf] %vm425, %v424
          %v428 = vunpack.c.l.b16 %v424
          %v429 = vpack.c.b16 %v428, %v428
          %430 = vrot.lane.b32.xlu0 %v429, 96
          %v431 = vpop.permute.xlu0 %430
          %433 = vst.msk [vmem:[%s293] sm:$0xf] %vm425, %v431
          %434 = vrot.lane.b32.xlu0 %v429, 64
          %v435 = vpop.permute.xlu0 %434
          %437 = vst.msk [vmem:[%s300] sm:$0xf] %vm425, %v435
          %438 = vrot.lane.b32.xlu0 %v429, 124
          %v439 = vpop.permute.xlu0 %438
          %s441 = scalar_lea.vmem %s286, 4 [#allocation8]
          %442 = vst.msk [vmem:[%s441] sm:$0xf] %vm425, %v439
          %443 = vrot.lane.b32.xlu0 %v429, 92
          %v444 = vpop.permute.xlu0 %443
          %s446 = scalar_lea.vmem %s293, 4 [#allocation9]
          %447 = vst.msk [vmem:[%s446] sm:$0xf] %vm425, %v444
          %448 = vrot.lane.b32.xlu0 %v429, 60
          %v449 = vpop.permute.xlu0 %448
          %s451 = scalar_lea.vmem %s300, 4 [#allocation11]
          %452 = vst.msk [vmem:[%s451] sm:$0xf] %vm425, %v449
          %453 = vrot.lane.b32.xlu0 %v429, 120
          %v454 = vpop.permute.xlu0 %453
          %s456 = scalar_lea.vmem %s286, 8 [#allocation8]
          %457 = vst.msk [vmem:[%s456] sm:$0xf] %vm425, %v454
          %458 = vrot.lane.b32.xlu0 %v429, 88
          %v459 = vpop.permute.xlu0 %458
          %s461 = scalar_lea.vmem %s293, 8 [#allocation9]
          %462 = vst.msk [vmem:[%s461] sm:$0xf] %vm425, %v459
          %463 = vrot.lane.b32.xlu0 %v429, 56
          %v464 = vpop.permute.xlu0 %463
          %s466 = scalar_lea.vmem %s300, 8 [#allocation11]
          %467 = vst.msk [vmem:[%s466] sm:$0xf] %vm425, %v464
          %468 = vrot.lane.b32.xlu0 %v429, 116
          %v469 = vpop.permute.xlu0 %468
          %s471 = scalar_lea.vmem %s286, 12 [#allocation8]
          %472 = vst.msk [vmem:[%s471] sm:$0xf] %vm425, %v469
          %473 = vrot.lane.b32.xlu0 %v429, 84
          %v474 = vpop.permute.xlu0 %473
          %s476 = scalar_lea.vmem %s293, 12 [#allocation9]
          %477 = vst.msk [vmem:[%s476] sm:$0xf] %vm425, %v474
          %478 = vrot.lane.b32.xlu0 %v429, 52
          %v479 = vpop.permute.xlu0 %478
          %s481 = scalar_lea.vmem %s300, 12 [#allocation11]
          %482 = vst.msk [vmem:[%s481] sm:$0xf] %vm425, %v479
          %483 = vrot.lane.b32.xlu0 %v429, 112
          %v484 = vpop.permute.xlu0 %483
          %s486 = scalar_lea.vmem %s286, 16 [#allocation8]
          %487 = vst.msk [vmem:[%s486] sm:$0xf] %vm425, %v484
          %488 = vrot.lane.b32.xlu0 %v429, 80
          %v489 = vpop.permute.xlu0 %488
          %s491 = scalar_lea.vmem %s293, 16 [#allocation9]
          %492 = vst.msk [vmem:[%s491] sm:$0xf] %vm425, %v489
          %493 = vrot.lane.b32.xlu0 %v429, 48
          %v494 = vpop.permute.xlu0 %493
          %s496 = scalar_lea.vmem %s300, 16 [#allocation11]
          %497 = vst.msk [vmem:[%s496] sm:$0xf] %vm425, %v494
          %498 = vrot.lane.b32.xlu0 %v429, 108
          %v499 = vpop.permute.xlu0 %498
          %s501 = scalar_lea.vmem %s286, 20 [#allocation8]
          %502 = vst.msk [vmem:[%s501] sm:$0xf] %vm425, %v499
          %503 = vrot.lane.b32.xlu0 %v429, 76
          %v504 = vpop.permute.xlu0 %503
          %s506 = scalar_lea.vmem %s293, 20 [#allocation9]
          %507 = vst.msk [vmem:[%s506] sm:$0xf] %vm425, %v504
          %508 = vrot.lane.b32.xlu0 %v429, 44
          %v509 = vpop.permute.xlu0 %508
          %s511 = scalar_lea.vmem %s300, 20 [#allocation11]
          %512 = vst.msk [vmem:[%s511] sm:$0xf] %vm425, %v509
          %513 = vrot.lane.b32.xlu0 %v429, 104
          %v514 = vpop.permute.xlu0 %513
          %s516 = scalar_lea.vmem %s286, 24 [#allocation8]
          %517 = vst.msk [vmem:[%s516] sm:$0xf] %vm425, %v514
          %518 = vrot.lane.b32.xlu0 %v429, 72
          %v519 = vpop.permute.xlu0 %518
          %s521 = scalar_lea.vmem %s293, 24 [#allocation9]
          %522 = vst.msk [vmem:[%s521] sm:$0xf] %vm425, %v519
          %523 = vrot.lane.b32.xlu0 %v429, 40
          %v524 = vpop.permute.xlu0 %523
          %s526 = scalar_lea.vmem %s300, 24 [#allocation11]
          %527 = vst.msk [vmem:[%s526] sm:$0xf] %vm425, %v524
          %528 = vrot.lane.b32.xlu0 %v429, 100
          %v529 = vpop.permute.xlu0 %528
          %s531 = scalar_lea.vmem %s286, 28 [#allocation8]
          %532 = vst.msk [vmem:[%s531] sm:$0xf] %vm425, %v529
          %533 = vrot.lane.b32.xlu0 %v429, 68
          %v534 = vpop.permute.xlu0 %533
          %s536 = scalar_lea.vmem %s293, 28 [#allocation9]
          %537 = vst.msk [vmem:[%s536] sm:$0xf] %vm425, %v534
          %538 = vrot.lane.b32.xlu0 %v429, 36
          %v539 = vpop.permute.xlu0 %538
          %s541 = scalar_lea.vmem %s300, 28 [#allocation11]
          %542 = vst.msk [vmem:[%s541] sm:$0xf] %vm425, %v539
        $region44: #{tpu_custom_call.1} parent=27 // pred_fallthru
          _
        %s543 = sand.u32 %s122, 1
        %s544 = scalar_lea.sflag [#allocation5], %s543
        %s545 = sand.u32 %s122, 1
        %s546 = smul.addr %s545, 32
        %s547 = scalar_lea.vmem [#allocation8], %s546
        %s548 = sand.u32 %s26, 1
        %s549 = scalar_lea.sflag [#allocation10], %s548
        %s550 = sand.u32 %s152, 1
        %s551 = smul.addr %s550, 32
        %s552 = scalar_lea.vmem [#allocation9], %s551
        %s553 = sand.u32 %s26, 1
        %s554 = scalar_lea.sflag [#allocation10], %s553
        %s555 = sand.u32 %s182, 1
        %s556 = smul.addr %s555, 32
        %s557 = scalar_lea.vmem [#allocation11], %s556
        // Predicated region
        $region45: #{tpu_custom_call.1} parent=27 // pred_check
          %p558 = pneg %p132
        $region46: #{tpu_custom_call.1} parent=27 // pred_check_branch
          %560 = sbr.rel (%p558) target = $region48
        $region47: #{tpu_custom_call.1} parent=27 // pred_region
          %s561 = smul.u32 8, %s34
          %s563 = ssub.s32 512, 512
          %564 = vsyncadd %s544, %s563
          %s565 = sadd.s32 %s33, %s561
          %s566 = smul.addr %s32, 8
          %s567 = sadd.s32 %s565, %s566
          %s568 = smul.addr %s567, 64
          %s569 = scalar_lea.hbm %s2, %s568
          %s570 = sshll.u32 %s547, 4
          %s571 = int_to_ptr.vmem [resolvable:$true] %s570
          %576 = dma.vmem_to_hbm [thread:$0]  %s571, 512, %s569, %s544, 64, 64, 4
        $region48: #{tpu_custom_call.1} parent=27 // pred_fallthru
          _
        // Predicated region
        $region49: #{tpu_custom_call.1} parent=27 // pred_check
          %p577 = pneg %p162
        $region50: #{tpu_custom_call.1} parent=27 // pred_check_branch
          %579 = sbr.rel (%p577) target = $region52
        $region51: #{tpu_custom_call.1} parent=27 // pred_region
          %s580 = smul.u32 8, %s34
          %s582 = ssub.s32 512, 512
          %583 = vsyncadd %s549, %s582
          %s584 = sadd.s32 %s33, %s580
          %s585 = smul.addr %s32, 8
          %s586 = sadd.s32 %s584, %s585
          %s587 = smul.addr %s586, 64
          %s588 = scalar_lea.hbm %s3, %s587
          %s589 = sshll.u32 %s552, 4
          %s590 = int_to_ptr.vmem [resolvable:$true] %s589
          %595 = dma.vmem_to_hbm [thread:$0]  %s590, 512, %s588, %s549, 64, 64, 4
        $region52: #{tpu_custom_call.1} parent=27 // pred_fallthru
          _
        // Predicated region
        $region53: #{tpu_custom_call.1} parent=27 // pred_check
          %p596 = pneg %p192
        $region54: #{tpu_custom_call.1} parent=27 // pred_check_branch
          %598 = sbr.rel (%p596) target = $region56
        $region55: #{tpu_custom_call.1} parent=27 // pred_region
          %s599 = smul.u32 8, %s34
          %s601 = ssub.s32 512, 512
          %602 = vsyncadd %s554, %s601
          %s603 = sadd.s32 %s33, %s599
          %s604 = smul.addr %s32, 8
          %s605 = sadd.s32 %s603, %s604
          %s606 = smul.addr %s605, 64
          %s607 = scalar_lea.hbm %s4, %s606
          %s608 = sshll.u32 %s557, 4
          %s609 = int_to_ptr.vmem [resolvable:$true] %s608
          %614 = dma.vmem_to_hbm [thread:$0]  %s609, 512, %s607, %s554, 64, 64, 4
        $region56: #{tpu_custom_call.1} parent=27 // pred_fallthru
          _
      $region28: #{tpu_custom_call.1} parent=5 // pred_fallthru
        _
      %p615 = scmp.le.s32.totalorder 2, %s21
      // Predicated region
      $region57: #{tpu_custom_call.1} parent=5 // pred_check
        %p616 = pneg %p615
      $region58: #{tpu_custom_call.1} parent=5 // pred_check_branch
        %618 = sbr.rel (%p616) target = $region60
      $region59: #{tpu_custom_call.1} parent=5 // pred_region
        %s619 = ssub.s32 %s21, 2
        // Predicated region
        $region61: #{tpu_custom_call.1} parent=59 // pred_check
          %p620 = pneg %p138
        $region62: #{tpu_custom_call.1} parent=59 // pred_check_branch
          %622 = sbr.rel (%p620) target = $region64
        $region63: #{tpu_custom_call.1} parent=59 // pred_region
          %s623 = sand.u32 %s123, 1
          %s624 = scalar_lea.sflag [#allocation5], %s623
          %s625 = sand.u32 %s123, 1
          %s626 = smul.addr %s625, 32
          %s627 = scalar_lea.vmem [#allocation8], %s626
          %628 = dma.done %s624, 512
        $region64: #{tpu_custom_call.1} parent=59 // pred_fallthru
          _
        // Predicated region
        $region65: #{tpu_custom_call.1} parent=59 // pred_check
          %p629 = pneg %p168
        $region66: #{tpu_custom_call.1} parent=59 // pred_check_branch
          %631 = sbr.rel (%p629) target = $region68
        $region67: #{tpu_custom_call.1} parent=59 // pred_region
          %s632 = sand.u32 %s27, 1
          %s633 = scalar_lea.sflag [#allocation10], %s632
          %s634 = sand.u32 %s153, 1
          %s635 = smul.addr %s634, 32
          %s636 = scalar_lea.vmem [#allocation9], %s635
          %637 = dma.done %s633, 512
        $region68: #{tpu_custom_call.1} parent=59 // pred_fallthru
          _
        // Predicated region
        $region69: #{tpu_custom_call.1} parent=59 // pred_check
          %p638 = pneg %p198
        $region70: #{tpu_custom_call.1} parent=59 // pred_check_branch
          %640 = sbr.rel (%p638) target = $region72
        $region71: #{tpu_custom_call.1} parent=59 // pred_region
          %s641 = sand.u32 %s27, 1
          %s642 = scalar_lea.sflag [#allocation10], %s641
          %s643 = sand.u32 %s183, 1
          %s644 = smul.addr %s643, 32
          %s645 = scalar_lea.vmem [#allocation11], %s644
          %646 = dma.done %s642, 512
        $region72: #{tpu_custom_call.1} parent=59 // pred_fallthru
          _
      $region60: #{tpu_custom_call.1} parent=5 // pred_fallthru
        _
    $region6: #{tpu_custom_call.1} parent=1 // loop_footer
      %s25 = sadd.s32 1, %s21
    $region7: #{tpu_custom_call.1} parent=1 // loop_footer_branch
      %20 = sbr.rel target = $region3
    $region8: #{tpu_custom_call.1} parent=1 // loop_exit
      _
    %647 = vsyncpa [#allocation4], 1
    %s648 = scalar_lea.sflag [#allocation4], 1
    %649 = vsyncpa %s648, 1
    %650 = vsyncpa [#allocation7], 1
    %651 = vsyncpa [#allocation5], 1
    %s652 = scalar_lea.sflag [#allocation5], 1
    %653 = vsyncpa %s652, 1
    %654 = vsyncpa [#allocation10], 1
    %s655 = scalar_lea.sflag [#allocation10], 1
    %656 = vsyncpa %s655, 1

</llo_original>
